<compile_context>
chip_gen: v5e
topology: v5e:2x2
jax: 0.10.0
libtpu: 0.0.40
codegen_flags: <defaults>
</compile_context>

<pallas_src>
import functools
import math

import jax
import jax.numpy as jnp
from jax.experimental import pallas as pl
from jax.experimental.pallas import tpu as pltpu

KERNEL_SIZE = 7
PAD = 3
EPS = 1e-6
HALO_ROWS = 8      # 3 left + 3 right + 2 alignment rows
XP_OFF = 8         # main tile sits 8-sublane aligned inside the conv scratch
H_CHUNK_MAX = 2048 # max live hidden-dim chunk per matmul1/GELU/matmul2 pass


def _convnext_block_kernel(x_ref, halo_ref, dww_ref, dwb_ref, w1_ref, b1_ref,
                           w2_ref, b2_ref, o_ref, xp_ref, *, n_hc):
    # x_ref   : (C, TL)         main tile in the ORIGINAL channels-first layout
    # halo_ref: (8, C)          rows 0..2 = left halo, rows 3..5 = right halo
    # dww_ref : (7, C)          depthwise conv taps (tap index first)
    # dwb_ref : (1, C)
    # w1_ref  : (C, 4C)  (LN affine folded in), b1_ref: (1, 4C)
    # w2_ref  : (4C, C), b2_ref: (1, C)
    # o_ref   : (C, TL)         output tile, channels-first
    # xp_ref  : (TL + 16, C)    f32 scratch: conv window with aligned main store
    C, TL = x_ref.shape
    H = w1_ref.shape[1]
    hc = H // n_hc

    x_cl = x_ref[...]                                      # (C, TL), also residual
    xt = jnp.transpose(x_cl).astype(jnp.float32)           # (TL, C) channels-last
    halo = halo_ref[...].astype(jnp.float32)                # (8, C)

    # ---- assemble conv window: main tile store is 8-sublane aligned ----
    xp_ref[XP_OFF - PAD:XP_OFF, :] = halo[0:PAD, :]
    xp_ref[XP_OFF:XP_OFF + TL, :] = xt
    xp_ref[XP_OFF + TL:XP_OFF + TL + PAD, :] = halo[PAD:2 * PAD, :]

    # ---- depthwise conv (k=7, pad=3) via 7 shifted slices (static unroll) ----
    acc = jnp.zeros((TL, C), jnp.float32)
    for k in range(KERNEL_SIZE):
        s = XP_OFF - PAD + k
        acc = acc + xp_ref[s:s + TL, :] * dww_ref[k, :].astype(jnp.float32)
    y = acc + dwb_ref[...].astype(jnp.float32)              # (TL, C)

    # ---- LayerNorm over C (eps=1e-6, biased var); affine folded into W1'/b1' ----
    mu = jnp.mean(y, axis=-1, keepdims=True)
    d = y - mu
    var = jnp.mean(d * d, axis=-1, keepdims=True)
    yh = d * jax.lax.rsqrt(var + EPS)                        # (TL, C) f32

    # ---- MLP: pwconv1 -> exact GELU -> pwconv2, chunked over H ----
    # matmul operands in weight dtype (bf16 by default), f32 accumulation;
    # all elementwise math stays f32 (no bf16 VPU/EUP on v5e).
    yh_m = yh.astype(w1_ref.dtype)
    inv_sqrt2 = jnp.float32(1.0 / math.sqrt(2.0))
    z = jnp.zeros((TL, C), jnp.float32)
    for c in range(n_hc):                                    # static H-chunk loop
        lo, hi = c * hc, (c + 1) * hc
        h = jnp.dot(yh_m, w1_ref[:, lo:hi],
                    preferred_element_type=jnp.float32)
        h = h + b1_ref[:, lo:hi].astype(jnp.float32)
        g = 0.5 * h * (1.0 + jax.lax.erf(h * inv_sqrt2))
        z = z + jnp.dot(g.astype(w2_ref.dtype), w2_ref[lo:hi, :],
                        preferred_element_type=jnp.float32)
    z = z + b2_ref[...].astype(jnp.float32)

    # ---- residual in original (C, L) layout; lane-dense store (lane dim = TL) ----
    o_ref[...] = (x_cl.astype(jnp.float32) + jnp.transpose(z)).astype(o_ref.dtype)


def _vmem_capacity_bytes():
    try:
        return int(pltpu.get_tpu_info().vmem_capacity_bytes)
    except Exception:
        return 64 << 20          # conservative fallback: v7x per-TensorCore VMEM


def _pick_h_chunks(H):
    if H <= H_CHUNK_MAX:
        return 1
    for d in (2, 4, 8, 16, 32):
        if H % d == 0 and H // d <= H_CHUNK_MAX:
            return d
    return 1


def _select_tile(B, L, C, hc, weight_bytes, max_tile_l, vmem_cap):
    """Pick the L-tile size from a generation-aware VMEM budget."""
    budget = int(0.70 * vmem_cap)
    act_budget = max(budget - weight_bytes, 4 << 20)
    # rough per-row bytes: tile in/out (dbl-buffered) + scratch + conv/LN temps
    # + (TL, hc) matmul/GELU temps (incl. bf16 casts)
    per_row = 56 * C + 16 * hc
    tl = int(act_budget // max(per_row, 1))
    tl = min(tl, int(max_tile_l))
    if tl >= L:
        # single tile fits; still split for B==1 so both v7x TCs / megacore work
        if B == 1 and L >= 256 and L % 256 == 0:
            return L // 2, 2, per_row
        return L, 1, per_row
    tl = max(128, (tl // 128) * 128)     # lane-dim tiles must be 128-aligned
    nt = -(-L // tl)
    return tl, nt, per_row


def convnext_v2_block_1d(x_ncl, params, *, use_bf16_matmul=True, max_tile_l=2048):
    """x_ncl: (B, C, L) -> (B, C, L). ConvNeXtV2Block1D forward (drop_path=0)."""
    B, C, L = x_ncl.shape
    H = 4 * C
    w_dtype = jnp.bfloat16 if use_bf16_matmul else jnp.float32
    itemsize_w = 2 if use_bf16_matmul else 4
    weight_bytes = 2 * C * H * itemsize_w + (KERNEL_SIZE + 2) * C * 4 + H * 4

    n_hc = _pick_h_chunks(H)
    hc = H // n_hc
    vmem_cap = _vmem_capacity_bytes()
    TL, NT, per_row = _select_tile(B, L, C, hc, weight_bytes, max_tile_l, vmem_cap)
    Lp = TL * NT

    # Input stays in its original (B, C, L) layout; pad L only if tiles demand it.
    x_main = x_ncl if Lp == L else jnp.pad(x_ncl, ((0, 0), (0, 0), (0, Lp - L)))

    # ---- tiny halo tensor (B, NT, 8, C): 3 columns on each side of every tile ----
    if NT == 1:
        halos = jnp.zeros((B, 1, HALO_ROWS, C), x_ncl.dtype)
    else:
        j = jnp.arange(NT)[:, None]
        p = jnp.arange(PAD)[None, :]
        left_idx = j * TL - PAD + p                      # (NT, 3)
        right_idx = (j + 1) * TL + p                     # (NT, 3)
        lcols = jnp.take(x_main, jnp.clip(left_idx, 0, Lp - 1).reshape(-1), axis=2)
        rcols = jnp.take(x_main, jnp.clip(right_idx, 0, Lp - 1).reshape(-1), axis=2)
        lcols = jnp.where((left_idx >= 0).reshape(1, 1, NT, PAD),
                          lcols.reshape(B, C, NT, PAD), 0)
        rcols = jnp.where((right_idx < L).reshape(1, 1, NT, PAD),
                          rcols.reshape(B, C, NT, PAD), 0)
        halos = jnp.concatenate(
            [lcols, rcols,
             jnp.zeros((B, C, NT, HALO_ROWS - 2 * PAD), lcols.dtype)], axis=3)
        halos = jnp.transpose(halos, (0, 2, 3, 1)).astype(x_ncl.dtype)   # (B,NT,8,C)

    # ---- parameters (LayerNorm affine folded into pwconv1, done once in f32) ----
    dww = params["dw_w"]                                            # (7, C)
    dwb = params["dw_b"][None, :]                                   # (1, C)
    w1 = (params["ln_w"][:, None] * params["w1"]).astype(w_dtype)   # (C, 4C)
    b1 = (params["b1"] + params["ln_b"] @ params["w1"])[None, :]    # (1, 4C) f32
    w2 = params["w2"].astype(w_dtype)                               # (4C, C)
    b2 = params["b2"][None, :]                                      # (1, C)

    # constants: whole array resident in VMEM, single-buffered (loaded once).
    const_spec = pl.BlockSpec(memory_space=pltpu.MemorySpace.VMEM)

    # generation-aware VMEM request, <= 75% of physical capacity for headroom.
    need = weight_bytes + per_row * TL
    vmem_limit = int(min(0.75 * vmem_cap, max(32 << 20, 1.4 * need)))

    kernel = functools.partial(_convnext_block_kernel, n_hc=n_hc)

    out = pl.pallas_call(
        kernel,
        out_shape=jax.ShapeDtypeStruct((B, C, Lp), x_ncl.dtype),
        grid_spec=pltpu.PrefetchScalarGridSpec(
            num_scalar_prefetch=0,
            grid=(B, NT),
            in_specs=[
                pl.BlockSpec((None, C, TL), lambda b, j: (b, 0, j)),      # x tile (NCL)
                pl.BlockSpec((None, None, HALO_ROWS, C),
                             lambda b, j: (b, j, 0, 0)),                  # halo
                const_spec,   # dw taps
                const_spec,   # dw bias
                const_spec,   # W1' (LN folded)
                const_spec,   # b1'
                const_spec,   # W2
                const_spec,   # b2
            ],
            out_specs=pl.BlockSpec((None, C, TL), lambda b, j: (b, 0, j)),
            scratch_shapes=[pltpu.VMEM((TL + 2 * XP_OFF, C), jnp.float32)],
        ),
        compiler_params=pltpu.CompilerParams(
            dimension_semantics=("parallel", "parallel"),
            vmem_limit_bytes=vmem_limit),
    )(x_main, halos, dww, dwb, w1, b1, w2, b2)

    return out if Lp == L else out[:, :, :L]


def _reference(x_ncl, params):
    """Pure-JAX reference (unfused math) for validation."""
    x = jnp.transpose(x_ncl, (0, 2, 1))                            # (B, L, C)
    L = x.shape[1]
    xp = jnp.pad(x, ((0, 0), (PAD, PAD), (0, 0)))
    acc = jnp.zeros_like(x)
    for k in range(KERNEL_SIZE):
        acc = acc + xp[:, k:k + L, :] * params["dw_w"][k][None, None, :]
    y = acc + params["dw_b"]
    mu = jnp.mean(y, axis=-1, keepdims=True)
    var = jnp.mean((y - mu) ** 2, axis=-1, keepdims=True)
    yn = (y - mu) / jnp.sqrt(var + EPS)
    yn = yn * params["ln_w"] + params["ln_b"]
    h = yn @ params["w1"] + params["b1"]
    h = 0.5 * h * (1.0 + jax.lax.erf(h / jnp.sqrt(2.0)))
    z = h @ params["w2"] + params["b2"]
    out = x + z
    return jnp.transpose(out, (0, 2, 1))


def init_params(key, dim):
    """Deterministic synthetic parameters matching the module's shapes.
    NOTE for real checkpoints: dwconv.weight (dim,1,7) -> transpose to (7,dim),
    Linear weights (out,in) -> transpose to (in,out)."""
    ks = jax.random.split(key, 8)
    H = 4 * dim
    dw_w = jax.random.normal(ks[0], (KERNEL_SIZE, dim), jnp.float32) * 0.2
    dw_b = jax.random.normal(ks[1], (dim,), jnp.float32) * 0.1
    ln_w = 1.0 + 0.1 * jax.random.normal(ks[2], (dim,), jnp.float32)
    ln_b = 0.1 * jax.random.normal(ks[3], (dim,), jnp.float32)
    w1 = jax.random.normal(ks[4], (dim, H), jnp.float32) * (1.0 / math.sqrt(dim))
    b1 = jax.random.normal(ks[5], (H,), jnp.float32) * 0.05
    w2 = jax.random.normal(ks[6], (H, dim), jnp.float32) * (1.0 / math.sqrt(H))
    b2 = jax.random.normal(ks[7], (dim,), jnp.float32) * 0.05
    return dict(dw_w=dw_w, dw_b=dw_b, ln_w=ln_w, ln_b=ln_b,
                w1=w1, b1=b1, w2=w2, b2=b2)


if __name__ == "__main__":
    key = jax.random.PRNGKey(0)
    kx, kp, kx2 = jax.random.split(key, 3)

    # ---- test 1: single-tile path, f32 matmuls (tight tolerance) ----
    B, C, L = 2, 8, 16
    x = jax.random.normal(kx, (B, C, L), jnp.float32)
    params = init_params(kp, C)
    out = jax.block_until_ready(convnext_v2_block_1d(x, params, use_bf16_matmul=False))
    ref = _reference(x, params)
    assert out.shape == (B, C, L)
    tol1 = 1e-4 * (1.0 + float(jnp.max(jnp.abs(ref))))
    assert float(jnp.max(jnp.abs(out - ref))) < tol1, "f32 single-tile mismatch"

    # ---- test 2: multi-tile path (halos + non-divisible L padding), f32 ----
    L2 = 300
    x2 = jax.random.normal(kx2, (B, C, L2), jnp.float32)
    out2 = jax.block_until_ready(
        convnext_v2_block_1d(x2, params, use_bf16_matmul=False, max_tile_l=128))
    ref2 = _reference(x2, params)
    assert out2.shape == (B, C, L2)
    tol2 = 1e-4 * (1.0 + float(jnp.max(jnp.abs(ref2))))
    assert float(jnp.max(jnp.abs(out2 - ref2))) < tol2, "f32 multi-tile mismatch"

    # ---- test 3: default bf16-matmul path (MXU-native), loose tolerance ----
    out3 = jax.block_until_ready(convnext_v2_block_1d(x2, params, max_tile_l=128))
    tol3 = 1e-1 * (1.0 + float(jnp.max(jnp.abs(ref2))))
    assert float(jnp.max(jnp.abs(out3 - ref2))) < tol3, "bf16 path mismatch"

    print("KERNEL_OK")
</pallas_src>

<mosaic_0001>
module attributes {stable_mosaic.version = 11 : i64} {
  func.func @_convnext_block_kernel(%arg0: i32, %arg1: i32, %arg2: memref<1x8x16xf32, #tpu.memory_space<vmem>>, %arg3: memref<1x1x8x8xf32, #tpu.memory_space<vmem>>, %arg4: memref<7x8xf32, #tpu.memory_space<vmem>>, %arg5: memref<1x8xf32, #tpu.memory_space<vmem>>, %arg6: memref<8x32xf32, #tpu.memory_space<vmem>>, %arg7: memref<1x32xf32, #tpu.memory_space<vmem>>, %arg8: memref<32x8xf32, #tpu.memory_space<vmem>>, %arg9: memref<1x8xf32, #tpu.memory_space<vmem>>, %arg10: memref<1x8x16xf32, #tpu.memory_space<vmem>>, %arg11: memref<32x8xf32, #tpu.memory_space<vmem>>) attributes {dimension_semantics = [#tpu.dimension_semantics<parallel>, #tpu.dimension_semantics<parallel>], iteration_bounds = array<i64: 2, 1>, scalar_prefetch = 0 : i64, scratch_operands = 1 : i64, tpu.core_type = #tpu.core_type<tc>, window_params = [{transform_indices = @transform_0, window_bounds = array<i64: 1, 8, 16>}, {transform_indices = @transform_1, window_bounds = array<i64: 1, 1, 8, 8>}, {pipeline_mode = #tpu.pipeline_mode<synchronous>, transform_indices = @transform_2, window_bounds = array<i64: 7, 8>}, {pipeline_mode = #tpu.pipeline_mode<synchronous>, transform_indices = @transform_3, window_bounds = array<i64: 1, 8>}, {pipeline_mode = #tpu.pipeline_mode<synchronous>, transform_indices = @transform_4, window_bounds = array<i64: 8, 32>}, {pipeline_mode = #tpu.pipeline_mode<synchronous>, transform_indices = @transform_5, window_bounds = array<i64: 1, 32>}, {pipeline_mode = #tpu.pipeline_mode<synchronous>, transform_indices = @transform_6, window_bounds = array<i64: 32, 8>}, {pipeline_mode = #tpu.pipeline_mode<synchronous>, transform_indices = @transform_7, window_bounds = array<i64: 1, 8>}, {transform_indices = @transform_8, window_bounds = array<i64: 1, 8, 16>}]} {
    %c0 = arith.constant 0 : index
    %c0_0 = arith.constant 0 : index
    %c0_1 = arith.constant 0 : index
    %0 = vector.load %arg2[%c0, %c0_0, %c0_1] : memref<1x8x16xf32, #tpu.memory_space<vmem>>, vector<1x8x16xf32>
    %1 = vector.shape_cast %0 : vector<1x8x16xf32> to vector<8x16xf32>
    %2 = tpu.transpose %1, [1, 0] : vector<8x16xf32> -> vector<16x8xf32>
    %c0_2 = arith.constant 0 : index
    %c0_3 = arith.constant 0 : index
    %c0_4 = arith.constant 0 : index
    %c0_5 = arith.constant 0 : index
    %3 = vector.load %arg3[%c0_2, %c0_3, %c0_4, %c0_5] : memref<1x1x8x8xf32, #tpu.memory_space<vmem>>, vector<1x1x8x8xf32>
    %4 = vector.shape_cast %3 : vector<1x1x8x8xf32> to vector<8x8xf32>
    %5 = vector.extract_strided_slice %4 {offsets = [0, 0], sizes = [3, 8], strides = [1, 1]} : vector<8x8xf32> to vector<3x8xf32>
    %c5 = arith.constant 5 : index
    %c0_6 = arith.constant 0 : index
    %6 = vector.load %arg11[%c5, %c0_6] : memref<32x8xf32, #tpu.memory_space<vmem>>, vector<3x8xf32>
    tpu.vector_store %arg11[%c5, %c0_6], %5 {strides = array<i32>} : memref<32x8xf32, #tpu.memory_space<vmem>>, vector<3x8xf32>,
    %c8 = arith.constant 8 : index
    %c0_7 = arith.constant 0 : index
    %7 = vector.load %arg11[%c8, %c0_7] : memref<32x8xf32, #tpu.memory_space<vmem>>, vector<16x8xf32>
    tpu.vector_store %arg11[%c8, %c0_7], %2 {strides = array<i32>} : memref<32x8xf32, #tpu.memory_space<vmem>>, vector<16x8xf32>,
    %8 = vector.extract_strided_slice %4 {offsets = [3, 0], sizes = [3, 8], strides = [1, 1]} : vector<8x8xf32> to vector<3x8xf32>
    %c24 = arith.constant 24 : index
    %c0_8 = arith.constant 0 : index
    %9 = vector.load %arg11[%c24, %c0_8] : memref<32x8xf32, #tpu.memory_space<vmem>>, vector<3x8xf32>
    tpu.vector_store %arg11[%c24, %c0_8], %8 {strides = array<i32>} : memref<32x8xf32, #tpu.memory_space<vmem>>, vector<3x8xf32>,
    %cst = arith.constant 0.000000e+00 : f32
    %10 = vector.broadcast %cst : f32 to vector<16x8xf32>
    %c5_9 = arith.constant 5 : index
    %c0_10 = arith.constant 0 : index
    %11 = vector.load %arg11[%c5_9, %c0_10] : memref<32x8xf32, #tpu.memory_space<vmem>>, vector<16x8xf32>
    %c0_11 = arith.constant 0 : index
    %c0_12 = arith.constant 0 : index
    %12 = vector.load %arg4[%c0_11, %c0_12] : memref<7x8xf32, #tpu.memory_space<vmem>>, vector<1x8xf32>
    %13 = vector.shape_cast %12 : vector<1x8xf32> to vector<8xf32>
    %14 = vector.shape_cast %13 : vector<8xf32> to vector<1x8xf32>
    %15 = vector.broadcast %14 : vector<1x8xf32> to vector<16x8xf32>
    %16 = arith.mulf %11, %15 : vector<16x8xf32>
    %17 = arith.addf %10, %16 : vector<16x8xf32>
    %c6 = arith.constant 6 : index
    %c0_13 = arith.constant 0 : index
    %18 = vector.load %arg11[%c6, %c0_13] : memref<32x8xf32, #tpu.memory_space<vmem>>, vector<16x8xf32>
    %c1 = arith.constant 1 : index
    %c0_14 = arith.constant 0 : index
    %19 = vector.load %arg4[%c1, %c0_14] : memref<7x8xf32, #tpu.memory_space<vmem>>, vector<1x8xf32>
    %20 = vector.shape_cast %19 : vector<1x8xf32> to vector<8xf32>
    %21 = vector.shape_cast %20 : vector<8xf32> to vector<1x8xf32>
    %22 = vector.broadcast %21 : vector<1x8xf32> to vector<16x8xf32>
    %23 = arith.mulf %18, %22 : vector<16x8xf32>
    %24 = arith.addf %17, %23 : vector<16x8xf32>
    %c7 = arith.constant 7 : index
    %c0_15 = arith.constant 0 : index
    %25 = vector.load %arg11[%c7, %c0_15] : memref<32x8xf32, #tpu.memory_space<vmem>>, vector<16x8xf32>
    %c2 = arith.constant 2 : index
    %c0_16 = arith.constant 0 : index
    %26 = vector.load %arg4[%c2, %c0_16] : memref<7x8xf32, #tpu.memory_space<vmem>>, vector<1x8xf32>
    %27 = vector.shape_cast %26 : vector<1x8xf32> to vector<8xf32>
    %28 = vector.shape_cast %27 : vector<8xf32> to vector<1x8xf32>
    %29 = vector.broadcast %28 : vector<1x8xf32> to vector<16x8xf32>
    %30 = arith.mulf %25, %29 : vector<16x8xf32>
    %31 = arith.addf %24, %30 : vector<16x8xf32>
    %c8_17 = arith.constant 8 : index
    %c0_18 = arith.constant 0 : index
    %32 = vector.load %arg11[%c8_17, %c0_18] : memref<32x8xf32, #tpu.memory_space<vmem>>, vector<16x8xf32>
    %c3 = arith.constant 3 : index
    %c0_19 = arith.constant 0 : index
    %33 = vector.load %arg4[%c3, %c0_19] : memref<7x8xf32, #tpu.memory_space<vmem>>, vector<1x8xf32>
    %34 = vector.shape_cast %33 : vector<1x8xf32> to vector<8xf32>
    %35 = vector.shape_cast %34 : vector<8xf32> to vector<1x8xf32>
    %36 = vector.broadcast %35 : vector<1x8xf32> to vector<16x8xf32>
    %37 = arith.mulf %32, %36 : vector<16x8xf32>
    %38 = arith.addf %31, %37 : vector<16x8xf32>
    %c9 = arith.constant 9 : index
    %c0_20 = arith.constant 0 : index
    %39 = vector.load %arg11[%c9, %c0_20] : memref<32x8xf32, #tpu.memory_space<vmem>>, vector<16x8xf32>
    %c4 = arith.constant 4 : index
    %c0_21 = arith.constant 0 : index
    %40 = vector.load %arg4[%c4, %c0_21] : memref<7x8xf32, #tpu.memory_space<vmem>>, vector<1x8xf32>
    %41 = vector.shape_cast %40 : vector<1x8xf32> to vector<8xf32>
    %42 = vector.shape_cast %41 : vector<8xf32> to vector<1x8xf32>
    %43 = vector.broadcast %42 : vector<1x8xf32> to vector<16x8xf32>
    %44 = arith.mulf %39, %43 : vector<16x8xf32>
    %45 = arith.addf %38, %44 : vector<16x8xf32>
    %c10 = arith.constant 10 : index
    %c0_22 = arith.constant 0 : index
    %46 = vector.load %arg11[%c10, %c0_22] : memref<32x8xf32, #tpu.memory_space<vmem>>, vector<16x8xf32>
    %c5_23 = arith.constant 5 : index
    %c0_24 = arith.constant 0 : index
    %47 = vector.load %arg4[%c5_23, %c0_24] : memref<7x8xf32, #tpu.memory_space<vmem>>, vector<1x8xf32>
    %48 = vector.shape_cast %47 : vector<1x8xf32> to vector<8xf32>
    %49 = vector.shape_cast %48 : vector<8xf32> to vector<1x8xf32>
    %50 = vector.broadcast %49 : vector<1x8xf32> to vector<16x8xf32>
    %51 = arith.mulf %46, %50 : vector<16x8xf32>
    %52 = arith.addf %45, %51 : vector<16x8xf32>
    %c11 = arith.constant 11 : index
    %c0_25 = arith.constant 0 : index
    %53 = vector.load %arg11[%c11, %c0_25] : memref<32x8xf32, #tpu.memory_space<vmem>>, vector<16x8xf32>
    %c6_26 = arith.constant 6 : index
    %c0_27 = arith.constant 0 : index
    %54 = vector.load %arg4[%c6_26, %c0_27] : memref<7x8xf32, #tpu.memory_space<vmem>>, vector<1x8xf32>
    %55 = vector.shape_cast %54 : vector<1x8xf32> to vector<8xf32>
    %56 = vector.shape_cast %55 : vector<8xf32> to vector<1x8xf32>
    %57 = vector.broadcast %56 : vector<1x8xf32> to vector<16x8xf32>
    %58 = arith.mulf %53, %57 : vector<16x8xf32>
    %59 = arith.addf %52, %58 : vector<16x8xf32>
    %c0_28 = arith.constant 0 : index
    %c0_29 = arith.constant 0 : index
    %60 = vector.load %arg5[%c0_28, %c0_29] : memref<1x8xf32, #tpu.memory_space<vmem>>, vector<1x8xf32>
    %61 = vector.broadcast %60 : vector<1x8xf32> to vector<16x8xf32>
    %62 = arith.addf %59, %61 : vector<16x8xf32>
    %cst_30 = arith.constant dense<0.000000e+00> : vector<16xf32>
    %63 = vector.multi_reduction <add>, %62, %cst_30 [1] : vector<16x8xf32> to vector<16xf32>
    %64 = vector.shape_cast %63 : vector<16xf32> to vector<16x1xf32>
    %cst_31 = arith.constant 8.000000e+00 : f32
    %65 = vector.broadcast %cst_31 : f32 to vector<16x1xf32>
    %66 = arith.divf %64, %65 : vector<16x1xf32>
    %67 = vector.broadcast %66 : vector<16x1xf32> to vector<16x8xf32>
    %68 = arith.subf %62, %67 : vector<16x8xf32>
    %69 = arith.mulf %68, %68 : vector<16x8xf32>
    %cst_32 = arith.constant dense<0.000000e+00> : vector<16xf32>
    %70 = vector.multi_reduction <add>, %69, %cst_32 [1] : vector<16x8xf32> to vector<16xf32>
    %71 = vector.shape_cast %70 : vector<16xf32> to vector<16x1xf32>
    %cst_33 = arith.constant 8.000000e+00 : f32
    %72 = vector.broadcast %cst_33 : f32 to vector<16x1xf32>
    %73 = arith.divf %71, %72 : vector<16x1xf32>
    %cst_34 = arith.constant 9.99999997E-7 : f32
    %74 = vector.broadcast %cst_34 : f32 to vector<16x1xf32>
    %75 = arith.addf %73, %74 : vector<16x1xf32>
    %76 = math.rsqrt %75 : vector<16x1xf32>
    %77 = vector.broadcast %76 : vector<16x1xf32> to vector<16x8xf32>
    %78 = arith.mulf %68, %77 : vector<16x8xf32>
    %cst_35 = arith.constant 0.000000e+00 : f32
    %79 = vector.broadcast %cst_35 : f32 to vector<16x8xf32>
    %c0_36 = arith.constant 0 : index
    %c0_37 = arith.constant 0 : index
    %80 = vector.load %arg6[%c0_36, %c0_37] : memref<8x32xf32, #tpu.memory_space<vmem>>, vector<8x32xf32>
    %cst_38 = arith.constant dense<0.000000e+00> : vector<16x32xf32>
    %81 = tpu.matmul %78, %80, %cst_38 {dimension_numbers = #tpu.dot_dimension_numbers<[1], [0], [0], [1], [0, 0, 1, 1], [], []>} : vector<16x8xf32>, vector<8x32xf32>, vector<16x32xf32> -> vector<16x32xf32>
    %c0_39 = arith.constant 0 : index
    %c0_40 = arith.constant 0 : index
    %82 = vector.load %arg7[%c0_39, %c0_40] : memref<1x32xf32, #tpu.memory_space<vmem>>, vector<1x32xf32>
    %83 = vector.broadcast %82 : vector<1x32xf32> to vector<16x32xf32>
    %84 = arith.addf %81, %83 : vector<16x32xf32>
    %cst_41 = arith.constant 5.000000e-01 : f32
    %85 = vector.broadcast %cst_41 : f32 to vector<16x32xf32>
    %86 = arith.mulf %85, %84 : vector<16x32xf32>
    %cst_42 = arith.constant 0.707106769 : f32
    %87 = vector.broadcast %cst_42 : f32 to vector<16x32xf32>
    %88 = arith.mulf %84, %87 : vector<16x32xf32>
    %89 = math.erf %88 : vector<16x32xf32>
    %cst_43 = arith.constant 1.000000e+00 : f32
    %90 = vector.broadcast %cst_43 : f32 to vector<16x32xf32>
    %91 = arith.addf %90, %89 : vector<16x32xf32>
    %92 = arith.mulf %86, %91 : vector<16x32xf32>
    %c0_44 = arith.constant 0 : index
    %c0_45 = arith.constant 0 : index
    %93 = vector.load %arg8[%c0_44, %c0_45] : memref<32x8xf32, #tpu.memory_space<vmem>>, vector<32x8xf32>
    %cst_46 = arith.constant dense<0.000000e+00> : vector<16x8xf32>
    %94 = tpu.matmul %92, %93, %cst_46 {dimension_numbers = #tpu.dot_dimension_numbers<[1], [0], [0], [1], [0, 0, 1, 1], [], []>} : vector<16x32xf32>, vector<32x8xf32>, vector<16x8xf32> -> vector<16x8xf32>
    %95 = arith.addf %79, %94 : vector<16x8xf32>
    %c0_47 = arith.constant 0 : index
    %c0_48 = arith.constant 0 : index
    %96 = vector.load %arg9[%c0_47, %c0_48] : memref<1x8xf32, #tpu.memory_space<vmem>>, vector<1x8xf32>
    %97 = vector.broadcast %96 : vector<1x8xf32> to vector<16x8xf32>
    %98 = arith.addf %95, %97 : vector<16x8xf32>
    %99 = tpu.transpose %98, [1, 0] : vector<16x8xf32> -> vector<8x16xf32>
    %100 = arith.addf %1, %99 : vector<8x16xf32>
    %c0_49 = arith.constant 0 : index
    %c0_50 = arith.constant 0 : index
    %c0_51 = arith.constant 0 : index
    %101 = vector.load %arg10[%c0_49, %c0_50, %c0_51] : memref<1x8x16xf32, #tpu.memory_space<vmem>>, vector<1x8x16xf32>
    %102 = vector.shape_cast %101 : vector<1x8x16xf32> to vector<8x16xf32>
    %103 = vector.shape_cast %100 : vector<8x16xf32> to vector<1x8x16xf32>
    tpu.vector_store %arg10[%c0_49, %c0_50, %c0_51], %103 {strides = array<i32>} : memref<1x8x16xf32, #tpu.memory_space<vmem>>, vector<1x8x16xf32>,
    return
  }
  func.func @transform_0(%arg0: i32, %arg1: i32) -> (i32, i32, i32) {
    %c0_i32 = arith.constant 0 : i32
    %c0_i32_0 = arith.constant 0 : i32
    return %arg0, %c0_i32, %arg1 : i32, i32, i32
  }
  func.func @transform_1(%arg0: i32, %arg1: i32) -> (i32, i32, i32, i32) {
    %c0_i32 = arith.constant 0 : i32
    %c0_i32_0 = arith.constant 0 : i32
    %c0_i32_1 = arith.constant 0 : i32
    return %arg0, %arg1, %c0_i32, %c0_i32_0 : i32, i32, i32, i32
  }
  func.func @transform_2(%arg0: i32, %arg1: i32) -> (i32, i32) {
    %c0_i32 = arith.constant 0 : i32
    %c0_i32_0 = arith.constant 0 : i32
    %c0_i32_1 = arith.constant 0 : i32
    return %c0_i32, %c0_i32_0 : i32, i32
  }
  func.func @transform_3(%arg0: i32, %arg1: i32) -> (i32, i32) {
    %c0_i32 = arith.constant 0 : i32
    %c0_i32_0 = arith.constant 0 : i32
    %c0_i32_1 = arith.constant 0 : i32
    return %c0_i32, %c0_i32_0 : i32, i32
  }
  func.func @transform_4(%arg0: i32, %arg1: i32) -> (i32, i32) {
    %c0_i32 = arith.constant 0 : i32
    %c0_i32_0 = arith.constant 0 : i32
    %c0_i32_1 = arith.constant 0 : i32
    return %c0_i32, %c0_i32_0 : i32, i32
  }
  func.func @transform_5(%arg0: i32, %arg1: i32) -> (i32, i32) {
    %c0_i32 = arith.constant 0 : i32
    %c0_i32_0 = arith.constant 0 : i32
    %c0_i32_1 = arith.constant 0 : i32
    return %c0_i32, %c0_i32_0 : i32, i32
  }
  func.func @transform_6(%arg0: i32, %arg1: i32) -> (i32, i32) {
    %c0_i32 = arith.constant 0 : i32
    %c0_i32_0 = arith.constant 0 : i32
    %c0_i32_1 = arith.constant 0 : i32
    return %c0_i32, %c0_i32_0 : i32, i32
  }
  func.func @transform_7(%arg0: i32, %arg1: i32) -> (i32, i32) {
    %c0_i32 = arith.constant 0 : i32
    %c0_i32_0 = arith.constant 0 : i32
    %c0_i32_1 = arith.constant 0 : i32
    return %c0_i32, %c0_i32_0 : i32, i32
  }
  func.func @transform_8(%arg0: i32, %arg1: i32) -> (i32, i32, i32) {
    %c0_i32 = arith.constant 0 : i32
    %c0_i32_0 = arith.constant 0 : i32
    return %arg0, %c0_i32, %arg1 : i32, i32, i32
  }
}

</mosaic_0001>

<llo_original>
// kernel: tpu_custom_call.1
$region0: #{tpu_custom_call.1}
  #allocation0 [shape = 'u32[]', space=smem, size = 0x4, offset = 0x4, fixed_abs, tag = 'smem constant byte address 0x4 - core index']
  #allocation1 [shape = 'u32[72,128]{1,0:T(1,128)}', space=vmem, size = 0x9000, scoped, tag = 'internal scratch']
  #allocation2 [shape = 'f32[32,8]{1,0:T(8,128)}', space=vmem, size = 0x4000, scoped, tag = 'scratch operand']
  %s0 = inlined_call_operand.vmem [shape: f32[2,8,16], index: 0, kind: input, shape index: {}]
  %s1 = inlined_call_operand.vmem [shape: f32[2,1,8,8], index: 1, kind: input, shape index: {}]
  %s2 = inlined_call_operand.vmem [shape: f32[7,8], index: 2, kind: input, shape index: {}]
  %s3 = inlined_call_operand.vmem [shape: f32[1,8], index: 3, kind: input, shape index: {}]
  %s4 = inlined_call_operand.hbm [shape: f32[8,32], index: 4, kind: input, shape index: {}]
  %s5 = inlined_call_operand.vmem [shape: f32[1,32], index: 5, kind: input, shape index: {}]
  %s6 = inlined_call_operand.vmem [shape: f32[32,8], index: 6, kind: input, shape index: {}]
  %s7 = inlined_call_operand.vmem [shape: f32[1,8], index: 7, kind: input, shape index: {}]
  %s8 = inlined_call_operand.hbm [shape: f32[2,8,16], index: 8, kind: output, shape index: {}]
  %s9 = sld [smem:[#allocation0]]
  $region69: #{tpu_custom_call.1} parent=0
    _
  %s11 = ssub.s32 1, %s9
  %s12 = scalar_select 0, %s11, %s9
  $region1: #{tpu_custom_call.1} parent=0
    #allocation3 [shape = 'u8[4096]{0}', space=vmem, size = 0x1000, scoped, tag = 'input window, operand 4, single buffered']
    #allocation4 [shape = 's32[2]{0}', space=sflag, size = 0x8, scoped, tag = 'scoped memory for tpu_custom_call.1']
    #allocation5 [shape = 's32[2]{0}', space=sflag, size = 0x8, scoped, tag = 'scoped memory for tpu_custom_call.1']
    #allocation6 [shape = 'u8[8192]{0}', space=vmem, size = 0x2000, scoped, tag = 'output window, operand 0']
    %13 = vsyncpa [#allocation4], 0
    %14 = vsyncpa [#allocation5], 0
    %s15 = scalar_lea.sflag [#allocation5], 1
    %16 = vsyncpa %s15, 0
    loop: start=0, step=1, limit=4
    $region2: #{tpu_custom_call.1} parent=1 // loop_pre_header
      _
    $region3: #{tpu_custom_call.1} parent=1 // loop_header
      %s18 = sphi 0, %s22
      %p19 = scmp.ge.s32.totalorder %s18, 4
      %s25 = sphi 0, %s37
      %s26 = sphi 0, %s33
      %s27 = sphi 0, %s25
      %s28 = sphi 0, %s26
      %s29 = sphi 0, %s27
      %s30 = sphi 0, %s28
      %s42 = sphi 0, %s44
      %s45 = sphi 0, %s42
      %s46 = sphi 0, %s45
      %s62 = sphi 0, %s46
      %s70 = sphi 0, %s72
      %s73 = sphi 0, %s70
      %s74 = sphi 0, %s73
      %s90 = sphi 0, %s74
      %s94 = sphi 0, %s94
      %s96 = sphi 0, %s94
      %s97 = sphi 0, %s96
      %s111 = sphi 0, %s97
      %s115 = sphi 0, %s115
      %s117 = sphi 0, %s115
      %s118 = sphi 0, %s117
      %s132 = sphi 0, %s118
      %s136 = sphi 0, %s136
      %s138 = sphi 0, %s136
      %s139 = sphi 0, %s138
      %s153 = sphi 0, %s139
      %s157 = sphi 0, %s157
      %s159 = sphi 0, %s157
      %s160 = sphi 0, %s159
      %s174 = sphi 0, %s160
      %s178 = sphi 0, %s178
      %s180 = sphi 0, %s178
      %s181 = sphi 0, %s180
      %s195 = sphi 0, %s181
      %s199 = sphi 0, %s199
      %s201 = sphi 0, %s199
      %s202 = sphi 0, %s201
      %s216 = sphi 0, %s202
      %s224 = sphi 0, %s226
      %s227 = sphi 0, %s224
      %s228 = sphi 0, %s227
      %s244 = sphi 0, %s228
    $region4: #{tpu_custom_call.1} parent=1 // loop_header_branch
      %21 = sbr.rel (%p19) target = $region8
    $region5: #{tpu_custom_call.1} parent=1 // loop_body
      %s23 = ssub.s32 %s18, 1
      %s24 = ssub.s32 %s18, 2
      %s31 = sadd.s32 1, %s26
      %p32 = scmp.ge.s32.totalorder %s31, 1
      %s33 = scalar_select %p32, 0, %s31
      %s34 = sadd.s32 1, %s25
      %s35 = scalar_select %p32, %s34, %s25
      %p36 = scmp.ge.s32.totalorder %s35, 2
      %s37 = scalar_select %p36, 0, %s35
      %s38 = ssub.s32 %s25, %s37
      %s39 = ssub.s32 %s26, %s33
      %s40 = sor.u32 %s38, %s39
      %p41 = scmp.eq.s32.totalorder %s40, 0
      %s43 = sadd.s32 %s42, 1
      %s44 = scalar_select %p41, %s42, %s43
      %p47 = pneg %p41
      %p48 = scmp.eq.s32.totalorder %s18, 1
      %p49 = por %p47, %p48
      %p50 = scmp.ne.s32.totalorder %s42, %s45
      %p51 = scmp.eq.s32.totalorder %s18, 0
      %p52 = por %p50, %p51
      %p53 = scmp.ne.s32.totalorder %s42, %s45
      %p54 = scmp.eq.s32.totalorder %s23, 1
      %p55 = por %p53, %p54
      %p56 = scmp.ne.s32.totalorder %s45, %s46
      %p57 = scmp.eq.s32.totalorder %s23, 0
      %p58 = por %p56, %p57
      %p59 = scmp.ne.s32.totalorder %s45, %s46
      %p60 = scmp.eq.s32.totalorder %s24, 1
      %p61 = por %p59, %p60
      %p63 = scmp.ne.s32.totalorder %s46, %s62
      %p64 = scmp.eq.s32.totalorder %s24, 0
      %p65 = por %p63, %p64
      %s66 = ssub.s32 %s25, %s37
      %s67 = ssub.s32 %s26, %s33
      %s68 = sor.u32 %s66, %s67
      %p69 = scmp.eq.s32.totalorder %s68, 0
      %s71 = sadd.s32 %s70, 1
      %s72 = scalar_select %p69, %s70, %s71
      %p75 = pneg %p69
      %p76 = scmp.eq.s32.totalorder %s18, 1
      %p77 = por %p75, %p76
      %p78 = scmp.ne.s32.totalorder %s70, %s73
      %p79 = scmp.eq.s32.totalorder %s18, 0
      %p80 = por %p78, %p79
      %p81 = scmp.ne.s32.totalorder %s70, %s73
      %p82 = scmp.eq.s32.totalorder %s23, 1
      %p83 = por %p81, %p82
      %p84 = scmp.ne.s32.totalorder %s73, %s74
      %p85 = scmp.eq.s32.totalorder %s23, 0
      %p86 = por %p84, %p85
      %p87 = scmp.ne.s32.totalorder %s73, %s74
      %p88 = scmp.eq.s32.totalorder %s24, 1
      %p89 = por %p87, %p88
      %p91 = scmp.ne.s32.totalorder %s74, %s90
      %p92 = scmp.eq.s32.totalorder %s24, 0
      %p93 = por %p91, %p92
      %s95 = sadd.s32 %s94, 1
      %p98 = scmp.eq.s32.totalorder %s18, 1
      %p99 = scmp.ne.s32.totalorder %s94, %s96
      %p100 = scmp.eq.s32.totalorder %s18, 0
      %p101 = por %p99, %p100
      %p102 = scmp.ne.s32.totalorder %s94, %s96
      %p103 = scmp.eq.s32.totalorder %s23, 1
      %p104 = por %p102, %p103
      %p105 = scmp.ne.s32.totalorder %s96, %s97
      %p106 = scmp.eq.s32.totalorder %s23, 0
      %p107 = por %p105, %p106
      %p108 = scmp.ne.s32.totalorder %s96, %s97
      %p109 = scmp.eq.s32.totalorder %s24, 1
      %p110 = por %p108, %p109
      %p112 = scmp.ne.s32.totalorder %s97, %s111
      %p113 = scmp.eq.s32.totalorder %s24, 0
      %p114 = por %p112, %p113
      %s116 = sadd.s32 %s115, 1
      %p119 = scmp.eq.s32.totalorder %s18, 1
      %p120 = scmp.ne.s32.totalorder %s115, %s117
      %p121 = scmp.eq.s32.totalorder %s18, 0
      %p122 = por %p120, %p121
      %p123 = scmp.ne.s32.totalorder %s115, %s117
      %p124 = scmp.eq.s32.totalorder %s23, 1
      %p125 = por %p123, %p124
      %p126 = scmp.ne.s32.totalorder %s117, %s118
      %p127 = scmp.eq.s32.totalorder %s23, 0
      %p128 = por %p126, %p127
      %p129 = scmp.ne.s32.totalorder %s117, %s118
      %p130 = scmp.eq.s32.totalorder %s24, 1
      %p131 = por %p129, %p130
      %p133 = scmp.ne.s32.totalorder %s118, %s132
      %p134 = scmp.eq.s32.totalorder %s24, 0
      %p135 = por %p133, %p134
      %s137 = sadd.s32 %s136, 1
      %p140 = scmp.eq.s32.totalorder %s18, 1
      %p141 = scmp.ne.s32.totalorder %s136, %s138
      %p142 = scmp.eq.s32.totalorder %s18, 0
      %p143 = por %p141, %p142
      %p144 = scmp.ne.s32.totalorder %s136, %s138
      %p145 = scmp.eq.s32.totalorder %s23, 1
      %p146 = por %p144, %p145
      %p147 = scmp.ne.s32.totalorder %s138, %s139
      %p148 = scmp.eq.s32.totalorder %s23, 0
      %p149 = por %p147, %p148
      %p150 = scmp.ne.s32.totalorder %s138, %s139
      %p151 = scmp.eq.s32.totalorder %s24, 1
      %p152 = por %p150, %p151
      %p154 = scmp.ne.s32.totalorder %s139, %s153
      %p155 = scmp.eq.s32.totalorder %s24, 0
      %p156 = por %p154, %p155
      %s158 = sadd.s32 %s157, 1
      %p161 = scmp.eq.s32.totalorder %s18, 1
      %p162 = scmp.ne.s32.totalorder %s157, %s159
      %p163 = scmp.eq.s32.totalorder %s18, 0
      %p164 = por %p162, %p163
      %p165 = scmp.ne.s32.totalorder %s157, %s159
      %p166 = scmp.eq.s32.totalorder %s23, 1
      %p167 = por %p165, %p166
      %p168 = scmp.ne.s32.totalorder %s159, %s160
      %p169 = scmp.eq.s32.totalorder %s23, 0
      %p170 = por %p168, %p169
      %p171 = scmp.ne.s32.totalorder %s159, %s160
      %p172 = scmp.eq.s32.totalorder %s24, 1
      %p173 = por %p171, %p172
      %p175 = scmp.ne.s32.totalorder %s160, %s174
      %p176 = scmp.eq.s32.totalorder %s24, 0
      %p177 = por %p175, %p176
      %s179 = sadd.s32 %s178, 1
      %p182 = scmp.eq.s32.totalorder %s18, 1
      %p183 = scmp.ne.s32.totalorder %s178, %s180
      %p184 = scmp.eq.s32.totalorder %s18, 0
      %p185 = por %p183, %p184
      %p186 = scmp.ne.s32.totalorder %s178, %s180
      %p187 = scmp.eq.s32.totalorder %s23, 1
      %p188 = por %p186, %p187
      %p189 = scmp.ne.s32.totalorder %s180, %s181
      %p190 = scmp.eq.s32.totalorder %s23, 0
      %p191 = por %p189, %p190
      %p192 = scmp.ne.s32.totalorder %s180, %s181
      %p193 = scmp.eq.s32.totalorder %s24, 1
      %p194 = por %p192, %p193
      %p196 = scmp.ne.s32.totalorder %s181, %s195
      %p197 = scmp.eq.s32.totalorder %s24, 0
      %p198 = por %p196, %p197
      %s200 = sadd.s32 %s199, 1
      %p203 = scmp.eq.s32.totalorder %s18, 1
      %p204 = scmp.ne.s32.totalorder %s199, %s201
      %p205 = scmp.eq.s32.totalorder %s18, 0
      %p206 = por %p204, %p205
      %p207 = scmp.ne.s32.totalorder %s199, %s201
      %p208 = scmp.eq.s32.totalorder %s23, 1
      %p209 = por %p207, %p208
      %p210 = scmp.ne.s32.totalorder %s201, %s202
      %p211 = scmp.eq.s32.totalorder %s23, 0
      %p212 = por %p210, %p211
      %p213 = scmp.ne.s32.totalorder %s201, %s202
      %p214 = scmp.eq.s32.totalorder %s24, 1
      %p215 = por %p213, %p214
      %p217 = scmp.ne.s32.totalorder %s202, %s216
      %p218 = scmp.eq.s32.totalorder %s24, 0
      %p219 = por %p217, %p218
      %s220 = ssub.s32 %s25, %s37
      %s221 = ssub.s32 %s26, %s33
      %s222 = sor.u32 %s220, %s221
      %p223 = scmp.eq.s32.totalorder %s222, 0
      %s225 = sadd.s32 %s224, 1
      %s226 = scalar_select %p223, %s224, %s225
      %p229 = pneg %p223
      %p230 = scmp.eq.s32.totalorder %s18, 1
      %p231 = por %p229, %p230
      %p232 = scmp.ne.s32.totalorder %s224, %s227
      %p233 = scmp.eq.s32.totalorder %s18, 0
      %p234 = por %p232, %p233
      %p235 = scmp.ne.s32.totalorder %s224, %s227
      %p236 = scmp.eq.s32.totalorder %s23, 1
      %p237 = por %p235, %p236
      %p238 = scmp.ne.s32.totalorder %s227, %s228
      %p239 = scmp.eq.s32.totalorder %s23, 0
      %p240 = por %p238, %p239
      %p241 = scmp.ne.s32.totalorder %s227, %s228
      %p242 = scmp.eq.s32.totalorder %s24, 1
      %p243 = por %p241, %p242
      %p245 = scmp.ne.s32.totalorder %s228, %s244
      %p246 = scmp.eq.s32.totalorder %s24, 0
      %p247 = por %p245, %p246
      %p248 = scmp.le.s32.totalorder 1, %s18
      %p249 = scmp.lt.s32.totalorder %s18, 3
      %p250 = pnand %p248, %p249
      %p251 = pneg %p250
      // Predicated region
      $region9: #{tpu_custom_call.1} parent=5 // pred_check
        _
      $region10: #{tpu_custom_call.1} parent=5 // pred_check_branch
        %253 = sbr.rel (%p250) target = $region12
      $region11: #{tpu_custom_call.1} parent=5 // pred_region
        %s254 = ssub.s32 %s18, 1
        // Predicated region
        $region13: #{tpu_custom_call.1} parent=11 // pred_check
          %p255 = pneg %p107
        $region14: #{tpu_custom_call.1} parent=11 // pred_check_branch
          %257 = sbr.rel (%p255) target = $region16
        $region15: #{tpu_custom_call.1} parent=11 // pred_region
          _
        $region16: #{tpu_custom_call.1} parent=11 // pred_fallthru
          _
        // Predicated region
        $region17: #{tpu_custom_call.1} parent=11 // pred_check
          %p258 = pneg %p128
        $region18: #{tpu_custom_call.1} parent=11 // pred_check_branch
          %260 = sbr.rel (%p258) target = $region20
        $region19: #{tpu_custom_call.1} parent=11 // pred_region
          _
        $region20: #{tpu_custom_call.1} parent=11 // pred_fallthru
          _
        // Predicated region
        $region21: #{tpu_custom_call.1} parent=11 // pred_check
          %p261 = pneg %p149
        $region22: #{tpu_custom_call.1} parent=11 // pred_check_branch
          %263 = sbr.rel (%p261) target = $region24
        $region23: #{tpu_custom_call.1} parent=11 // pred_region
          %265 = vsyncadd [#allocation4], 0
          %s267 = sshll.u32 %s4, 4
          %s268 = int_to_ptr.hbm [resolvable:$true] %s267
          %s269 = sshll.u32 [#allocation3], 4
          %s270 = int_to_ptr.vmem [resolvable:$true] %s269
          %272 = dma.hbm_to_vmem [thread:$0]  %s268, 128, %s270, [#allocation4]
        $region24: #{tpu_custom_call.1} parent=11 // pred_fallthru
          _
        // Predicated region
        $region25: #{tpu_custom_call.1} parent=11 // pred_check
          %p273 = pneg %p170
        $region26: #{tpu_custom_call.1} parent=11 // pred_check_branch
          %275 = sbr.rel (%p273) target = $region28
        $region27: #{tpu_custom_call.1} parent=11 // pred_region
          _
        $region28: #{tpu_custom_call.1} parent=11 // pred_fallthru
          _
        // Predicated region
        $region29: #{tpu_custom_call.1} parent=11 // pred_check
          %p276 = pneg %p191
        $region30: #{tpu_custom_call.1} parent=11 // pred_check_branch
          %278 = sbr.rel (%p276) target = $region32
        $region31: #{tpu_custom_call.1} parent=11 // pred_region
          _
        $region32: #{tpu_custom_call.1} parent=11 // pred_fallthru
          _
        // Predicated region
        $region33: #{tpu_custom_call.1} parent=11 // pred_check
          %p279 = pneg %p212
        $region34: #{tpu_custom_call.1} parent=11 // pred_check_branch
          %281 = sbr.rel (%p279) target = $region36
        $region35: #{tpu_custom_call.1} parent=11 // pred_region
          _
        $region36: #{tpu_custom_call.1} parent=11 // pred_fallthru
          _
      $region12: #{tpu_custom_call.1} parent=5 // pred_fallthru
        _
      %p282 = scmp.lt.s32.totalorder %s18, 2
      // Predicated region
      $region37: #{tpu_custom_call.1} parent=5 // pred_check
        %p283 = pneg %p282
      $region38: #{tpu_custom_call.1} parent=5 // pred_check_branch
        %285 = sbr.rel (%p283) target = $region40
      $region39: #{tpu_custom_call.1} parent=5 // pred_region
        // Predicated region
        $region41: #{tpu_custom_call.1} parent=39 // pred_check
          %p286 = pneg %p52
        $region42: #{tpu_custom_call.1} parent=39 // pred_check_branch
          %288 = sbr.rel (%p286) target = $region44
        $region43: #{tpu_custom_call.1} parent=39 // pred_region
          %p289 = scmp.lt.s32.totalorder %s25, 1
          %s290 = scalar_select %p289, %s25, 1
          %p291 = scmp.lt.s32.totalorder %s26, 0
          %s292 = scalar_select %p291, %s26, 0
          %s293 = sadd.s32 %s292, %s290
          %s294 = smul.addr %s293, 8
          %s295 = scalar_lea.vmem %s0, %s294
        $region44: #{tpu_custom_call.1} parent=39 // pred_fallthru
          _
        // Predicated region
        $region45: #{tpu_custom_call.1} parent=39 // pred_check
          %p296 = pneg %p80
        $region46: #{tpu_custom_call.1} parent=39 // pred_check_branch
          %298 = sbr.rel (%p296) target = $region48
        $region47: #{tpu_custom_call.1} parent=39 // pred_region
          %p299 = scmp.lt.s32.totalorder %s25, 1
          %s300 = scalar_select %p299, %s25, 1
          %p301 = scmp.lt.s32.totalorder %s26, 0
          %s302 = scalar_select %p301, %s26, 0
          %s303 = sadd.s32 %s302, %s300
          %s304 = smul.addr %s303, 8
          %s305 = scalar_lea.vmem %s1, %s304
        $region48: #{tpu_custom_call.1} parent=39 // pred_fallthru
          _
      $region40: #{tpu_custom_call.1} parent=5 // pred_fallthru
        _
      %p306 = scmp.le.s32.totalorder 1, %s18
      %p307 = scmp.lt.s32.totalorder %s18, 3
      %p308 = pnand %p306, %p307
      %p309 = pneg %p308
      // Predicated region
      $region49: #{tpu_custom_call.1} parent=5 // pred_check
        _
      $region50: #{tpu_custom_call.1} parent=5 // pred_check_branch
        %311 = sbr.rel (%p308) target = $region52
      $region51: #{tpu_custom_call.1} parent=5 // pred_region
        %s312 = ssub.s32 %s18, 1
        // Predicated region
        $region53: #{tpu_custom_call.1} parent=51 // pred_check
          %p313 = pneg %p149
        $region54: #{tpu_custom_call.1} parent=51 // pred_check_branch
          %315 = sbr.rel (%p313) target = $region56
        $region55: #{tpu_custom_call.1} parent=51 // pred_region
          %317 = dma.done [#allocation4], 128
        $region56: #{tpu_custom_call.1} parent=51 // pred_fallthru
          _
        %p318 = scmp.lt.s32.totalorder %s27, 1
        %s319 = scalar_select %p318, %s27, 1
        %p320 = scmp.lt.s32.totalorder %s28, 0
        %s321 = scalar_select %p320, %s28, 0
        %s322 = sadd.s32 %s321, %s319
        %s323 = smul.addr %s322, 8
        %s324 = scalar_lea.vmem %s0, %s323
        %p325 = pneg %p58
        %p326 = pneg %p55
        %p327 = scmp.lt.s32.totalorder %s27, 1
        %s328 = scalar_select %p327, %s27, 1
        %p329 = scmp.lt.s32.totalorder %s28, 0
        %s330 = scalar_select %p329, %s28, 0
        %s331 = sadd.s32 %s330, %s328
        %s332 = smul.addr %s331, 8
        %s333 = scalar_lea.vmem %s1, %s332
        %p334 = pneg %p86
        %p335 = pneg %p83
        %p336 = pneg %p107
        %p337 = pneg %p104
        %p338 = pneg %p128
        %p339 = pneg %p125
        %p340 = pneg %p149
        %p341 = pneg %p146
        %p342 = pneg %p170
        %p343 = pneg %p167
        %p344 = pneg %p191
        %p345 = pneg %p188
        %p346 = pneg %p212
        %p347 = pneg %p209
        %p348 = pneg %p240
        %p349 = pneg %p237
        %s350 = sand.u32 %s227, 1
        %s351 = scalar_lea.sflag [#allocation5], %s350
        %s352 = sand.u32 %s227, 1
        %s353 = smul.addr %s352, 8
        %s354 = scalar_lea.vmem [#allocation6], %s353
        %p355 = scmp.lt.s32.totalorder %s27, 1
        %s356 = scalar_select %p355, %s27, 1
        %p357 = scmp.lt.s32.totalorder %s28, 0
        %s358 = scalar_select %p357, %s28, 0
        %s359 = sadd.s32 %s358, %s356
        %s360 = smul.addr %s359, 8
        %s361 = scalar_lea.vmem %s0, %s360
        %p362 = scmp.lt.s32.totalorder %s27, 1
        %s363 = scalar_select %p362, %s27, 1
        %p364 = scmp.lt.s32.totalorder %s28, 0
        %s365 = scalar_select %p364, %s28, 0
        %s366 = sadd.s32 %s365, %s363
        %s367 = smul.addr %s366, 8
        %s368 = scalar_lea.vmem %s1, %s367
        %v369 = vld [vmem:[%s361] sm:$0xff]
        %370 = vxpose.xlu0.b32.start [1/16] %v369, 128
        %371 = vxpose.xlu0.b32.cont [2/16] 0.0, 128
        %372 = vxpose.xlu0.b32.cont [3/16] 0.0, 128
        %373 = vxpose.xlu0.b32.cont [4/16] 0.0, 128
        %374 = vxpose.xlu0.b32.cont [5/16] 0.0, 128
        %375 = vxpose.xlu0.b32.cont [6/16] 0.0, 128
        %376 = vxpose.xlu0.b32.cont [7/16] 0.0, 128
        %377 = vxpose.xlu0.b32.cont [8/16] 0.0, 128
        %378 = vxpose.xlu0.b32.cont [9/16] 0.0, 128
        %379 = vxpose.xlu0.b32.cont [10/16] 0.0, 128
        %380 = vxpose.xlu0.b32.cont [11/16] 0.0, 128
        %381 = vxpose.xlu0.b32.cont [12/16] 0.0, 128
        %382 = vxpose.xlu0.b32.cont [13/16] 0.0, 128
        %383 = vxpose.xlu0.b32.cont [14/16] 0.0, 128
        %384 = vxpose.xlu0.b32.cont [15/16] 0.0, 128
        %385 = vxpose.xlu0.b32.end [16/16] 0.0, 128
        %v386 = vpop.trf.xlu0
        %v387 = vpop.trf.xlu0
        %v388 = vpop.trf.xlu0
        %v389 = vpop.trf.xlu0
        %v390 = vpop.trf.xlu0
        %v391 = vpop.trf.xlu0
        %v392 = vpop.trf.xlu0
        %v393 = vpop.trf.xlu0
        %v394 = vpop.trf.xlu0
        %v395 = vpop.trf.xlu0
        %v396 = vpop.trf.xlu0
        %v397 = vpop.trf.xlu0
        %v398 = vpop.trf.xlu0
        %v399 = vpop.trf.xlu0
        %v400 = vpop.trf.xlu0
        %v401 = vpop.trf.xlu0
        %v402 = vld [vmem:[%s368] sm:$0xff]
        %vm403 = vcmask 59392
        %404 = vst.msk [vmem:[#allocation2 + $0x5] sm:$0x7] %vm403, %v402
        %vm405 = vcmask 64512
        %406 = vst.msk [vmem:[#allocation2 + $0x8] sm:$0xff] %vm405, %v386
        %407 = vst.msk [vmem:[#allocation2 + $0x10] sm:$0xff] %vm405, %v387
        %vm408 = vcmask 62467
        %409 = vst.msk [vmem:[#allocation2 + $0x15] sm:$0x38] %vm408, %v402
        %v410 = vld [vmem:[#allocation2 + $0x5] sm:$0xff]
        %v411 = vld [vmem:[#allocation2 + $0xd] sm:$0xff]
        %v412 = vld [vmem:[%s2] sm:$0x1]
        %v413 = vperm.slane %v412, 0
        %v414 = vmul.f32 %v410, %v413
        %v415 = vmul.f32 %v411, %v413
        %v416 = vadd.f32 %v414, 0.0
        %v417 = vadd.f32 %v415, 0.0
        %v418 = vld [vmem:[#allocation2 + $0x6] sm:$0xff]
        %v419 = vld [vmem:[#allocation2 + $0xe] sm:$0xff]
        %v420 = vld [vmem:[%s2 + $0x1] sm:$0x1]
        %v421 = vperm.slane %v420, 0
        %v422 = vmul.f32 %v418, %v421
        %v423 = vmul.f32 %v419, %v421
        %v424 = vadd.f32 %v416, %v422
        %v425 = vadd.f32 %v417, %v423
        %v426 = vld [vmem:[#allocation2 + $0x7] sm:$0xff]
        %v427 = vld [vmem:[#allocation2 + $0xf] sm:$0xff]
        %v428 = vld [vmem:[%s2 + $0x2] sm:$0x1]
        %v429 = vperm.slane %v428, 0
        %v430 = vmul.f32 %v426, %v429
        %v431 = vmul.f32 %v427, %v429
        %v432 = vadd.f32 %v424, %v430
        %v433 = vadd.f32 %v425, %v431
        %v434 = vld [vmem:[#allocation2 + $0x8] sm:$0xff]
        %v435 = vld [vmem:[#allocation2 + $0x10] sm:$0xff]
        %v436 = vld [vmem:[%s2 + $0x3] sm:$0x1]
        %v437 = vperm.slane %v436, 0
        %v438 = vmul.f32 %v434, %v437
        %v439 = vmul.f32 %v435, %v437
        %v440 = vadd.f32 %v432, %v438
        %v441 = vadd.f32 %v433, %v439
        %v442 = vld [vmem:[#allocation2 + $0x9] sm:$0xff]
        %v443 = vld [vmem:[#allocation2 + $0x11] sm:$0xff]
        %v444 = vld [vmem:[%s2 + $0x4] sm:$0x1]
        %v445 = vperm.slane %v444, 0
        %v446 = vmul.f32 %v442, %v445
        %v447 = vmul.f32 %v443, %v445
        %v448 = vadd.f32 %v440, %v446
        %v449 = vadd.f32 %v441, %v447
        %v450 = vld [vmem:[#allocation2 + $0xa] sm:$0xff]
        %v451 = vld [vmem:[#allocation2 + $0x12] sm:$0xff]
        %v452 = vld [vmem:[%s2 + $0x5] sm:$0x1]
        %v453 = vperm.slane %v452, 0
        %v454 = vmul.f32 %v450, %v453
        %v455 = vmul.f32 %v451, %v453
        %v456 = vadd.f32 %v448, %v454
        %v457 = vadd.f32 %v449, %v455
        %v458 = vld [vmem:[#allocation2 + $0xb] sm:$0xff]
        %v459 = vld [vmem:[#allocation2 + $0x13] sm:$0xff]
        %v460 = vld [vmem:[%s2 + $0x6] sm:$0x1]
        %v461 = vperm.slane %v460, 0
        %v462 = vmul.f32 %v458, %v461
        %v463 = vmul.f32 %v459, %v461
        %v464 = vadd.f32 %v456, %v462
        %v465 = vadd.f32 %v457, %v463
        %v466 = vld [vmem:[%s3] sm:$0x1]
        %v468 = vperm.slane %v466, 0
        %v470 = vadd.f32 %v464, %v468
        %v471 = vadd.f32 %v465, %v468
        %v472 = vsel %vm405, %v470, 0.0
        %473 = vadd.xlane.f32.xlu0 %v472
        %v474 = vpop.xlane.xlu0 %473
        %v475 = vsel %vm405, %v471, 0.0
        %476 = vadd.xlane.f32.xlu0 %v475
        %v477 = vpop.xlane.xlu0 %476
        %v478 = vrcp.pop 8.0
        %v479 = vmul.f32 8.0, %v478
        %v480 = vsub.f32 1.0, %v479
        %v481 = vmul.f32 %v478, %v480
        %v482 = vadd.f32 %v478, %v481
        %vm483 = vweird.f32 %v478
        %v484 = vsel %vm483, %v478, %v482
        %v485 = vmul.f32 %v474, %v484
        %v486 = vmul.f32 %v477, %v484
        %v487 = vsub.f32 %v470, %v485
        %v488 = vsub.f32 %v471, %v486
        %v489 = vmul.f32 %v487, %v487
        %v490 = vmul.f32 %v488, %v488
        %v491 = vsel %vm405, %v489, 0.0
        %492 = vadd.xlane.f32.xlu0 %v491
        %v493 = vpop.xlane.xlu0 %492
        %v494 = vsel %vm405, %v490, 0.0
        %495 = vadd.xlane.f32.xlu0 %v494
        %v496 = vpop.xlane.xlu0 %495
        %v497 = vmul.f32 %v493, %v484
        %v498 = vmul.f32 %v496, %v484
        %v499 = vadd.f32 %v497, 1e-06
        %v500 = vadd.f32 %v498, 1e-06
        %v501 = vrsqrt.pop %v499
        %v502 = vmul.f32 %v501, %v499
        %v503 = vmul.f32 %v502, %v501
        %v504 = vmul.f32 0.5, %v503
        %v505 = vsub.f32 1.5, %v504
        %v506 = vmul.f32 %v501, %v505
        %vm507 = vweird.f32 %v499
        %vm508 = vweird.f32 %v501
        %vm509 = vmor %vm507, %vm508
        %v510 = vsel %vm509, %v501, %v506
        %v511 = vrsqrt.pop %v500
        %v512 = vmul.f32 %v511, %v500
        %v513 = vmul.f32 %v512, %v511
        %v514 = vmul.f32 0.5, %v513
        %v515 = vsub.f32 1.5, %v514
        %v516 = vmul.f32 %v511, %v515
        %vm517 = vweird.f32 %v500
        %vm518 = vweird.f32 %v511
        %vm519 = vmor %vm517, %vm518
        %v520 = vsel %vm519, %v511, %v516
        %v521 = vmul.f32 %v487, %v510
        %v522 = vmul.f32 %v488, %v520
        %v523 = vld [vmem:[#allocation3] sm:$0xff]
        %v524 = vld [vmem:[%s5] sm:$0x1]
        %v526 = vperm.slane %v524, 0
        %v529 = vsel %vm405, %v521, 0
        %v532 = vsel %vm405, %v522, 0
        %534 = vmatpush.msra.mxu0 0.0
        %535 = vmatpush.msra.mxu0 0.0
        %536 = vmatpush.msra.mxu0 0.0
        %537 = vmatpush.msra.mxu0 0.0
        %538 = vmatpush.msra.mxu0 0.0
        %539 = vmatpush.msra.mxu0 0.0
        %540 = vmatpush.msra.mxu0 0.0
        %541 = vmatpush.msra.mxu0 0.0
        %542 = vmatpush.msra.mxu0 0.0
        %543 = vmatpush.msra.mxu0 0.0
        %544 = vmatpush.msra.mxu0 0.0
        %545 = vmatpush.msra.mxu0 0.0
        %546 = vmatpush.msra.mxu0 0.0
        %547 = vmatpush.msra.mxu0 0.0
        %548 = vmatpush.msra.mxu0 0.0
        %549 = vmatpush.msra.mxu0 %v523
        %550 = vmatmul.f32.gmra.mxu0 %v529
        %v551 = vpop.f32.mrf.mxu0
        %v552 = vadd.f32 %v526, %v551
        %553 = vmatmul.f32.gmra.mxu0 %v532
        %v554 = vpop.f32.mrf.mxu0
        %v555 = vadd.f32 %v526, %v554
        %556 = vdwg.mxu0
        %v557 = vmul.f32 %v552, 0.5
        %v558 = vmul.f32 %v555, 0.5
        %v559 = vmul.f32 %v552, 0.70710677
        %v560 = vmul.f32 %v555, 0.70710677
        %v561 = vmul.f32 %v559, %v559
        %v562 = vmin.f32 16.0, %v561
        %v563 = vmul.f32 %v562, 2.1237322e-06
        %v564 = vadd.f32 %v563, 0.00028619796
        %v565 = vmul.f32 %v562, %v564
        %v566 = vadd.f32 %v565, 0.0036580483
        %v567 = vmul.f32 %v562, %v566
        %v568 = vadd.f32 %v567, 0.05243302
        %v569 = vmul.f32 %v562, %v568
        %v570 = vadd.f32 %v569, 0.18741608
        %v571 = vmul.f32 %v562, %v570
        %v572 = vadd.f32 %v571, 1.1283791
        %v573 = vmul.f32 %v559, %v572
        %v574 = vmul.f32 %v562, 3.8918573e-05
        %v575 = vadd.f32 %v574, 0.001143296
        %v576 = vmul.f32 %v562, %v575
        %v577 = vadd.f32 %v576, 0.014752088
        %v578 = vmul.f32 %v562, %v577
        %v579 = vadd.f32 %v578, 0.112945676
        %v580 = vmul.f32 %v562, %v579
        %v581 = vadd.f32 %v580, 0.4994258
        %v582 = vmul.f32 %v562, %v581
        %v583 = vadd.f32 %v582, 1.0
        %v584 = vrcp.pop %v583
        %v585 = vmul.f32 %v583, %v584
        %v586 = vsub.f32 1.0, %v585
        %v587 = vmul.f32 %v584, %v586
        %v588 = vadd.f32 %v584, %v587
        %vm589 = vweird.f32 %v583
        %vm590 = vweird.f32 %v584
        %vm591 = vmor %vm589, %vm590
        %v592 = vsel %vm591, %v584, %v588
        %v593 = vand.u32 2147483647, %v583
        %vm594 = vcmp.eq.f32.partialorder %v593, 8.507059e+37
        %v595 = vand.u32 %v583, 2147483648
        %v596 = vor.u32 1.1754944e-38, %v595
        %v597 = vsel %vm594, %v596, %v592
        %v598 = vmul.f32 %v573, %v597
        %v599 = vmin.f32 %v598, 1.0
        %v600 = vmax.f32 %v599, -1.0
        %v601 = vmul.f32 %v560, %v560
        %v602 = vmin.f32 16.0, %v601
        %v603 = vmul.f32 %v602, 2.1237322e-06
        %v604 = vadd.f32 %v603, 0.00028619796
        %v605 = vmul.f32 %v602, %v604
        %v606 = vadd.f32 %v605, 0.0036580483
        %v607 = vmul.f32 %v602, %v606
        %v608 = vadd.f32 %v607, 0.05243302
        %v609 = vmul.f32 %v602, %v608
        %v610 = vadd.f32 %v609, 0.18741608
        %v611 = vmul.f32 %v602, %v610
        %v612 = vadd.f32 %v611, 1.1283791
        %v613 = vmul.f32 %v560, %v612
        %v614 = vmul.f32 %v602, 3.8918573e-05
        %v615 = vadd.f32 %v614, 0.001143296
        %v616 = vmul.f32 %v602, %v615
        %v617 = vadd.f32 %v616, 0.014752088
        %v618 = vmul.f32 %v602, %v617
        %v619 = vadd.f32 %v618, 0.112945676
        %v620 = vmul.f32 %v602, %v619
        %v621 = vadd.f32 %v620, 0.4994258
        %v622 = vmul.f32 %v602, %v621
        %v623 = vadd.f32 %v622, 1.0
        %v624 = vrcp.pop %v623
        %v625 = vmul.f32 %v623, %v624
        %v626 = vsub.f32 1.0, %v625
        %v627 = vmul.f32 %v624, %v626
        %v628 = vadd.f32 %v624, %v627
        %vm629 = vweird.f32 %v623
        %vm630 = vweird.f32 %v624
        %vm631 = vmor %vm629, %vm630
        %v632 = vsel %vm631, %v624, %v628
        %v633 = vand.u32 2147483647, %v623
        %vm634 = vcmp.eq.f32.partialorder %v633, 8.507059e+37
        %v635 = vand.u32 %v623, 2147483648
        %v636 = vor.u32 1.1754944e-38, %v635
        %v637 = vsel %vm634, %v636, %v632
        %v638 = vmul.f32 %v613, %v637
        %v639 = vmin.f32 %v638, 1.0
        %v640 = vmax.f32 %v639, -1.0
        %v641 = vadd.f32 %v600, 1.0
        %v642 = vadd.f32 %v640, 1.0
        %v643 = vmul.f32 %v557, %v641
        %v644 = vmul.f32 %v558, %v642
        %v645 = vld [vmem:[%s6] sm:$0xff]
        %v646 = vld [vmem:[%s6 + $0x8] sm:$0xff]
        %v647 = vld [vmem:[%s6 + $0x10] sm:$0xff]
        %v648 = vld [vmem:[%s6 + $0x18] sm:$0xff]
        %v649 = vld [vmem:[%s7] sm:$0x1]
        %v651 = vperm.slane %v649, 0
        %vm653 = vcmask 261120
        %v655 = vsel %vm653, %v643, 0
        %v658 = vsel %vm653, %v644, 0
        %660 = vmatpush.msra.mxu0 0.0
        %661 = vmatpush.msra.mxu0 0.0
        %662 = vmatpush.msra.mxu0 0.0
        %663 = vmatpush.msra.mxu0 0.0
        %664 = vmatpush.msra.mxu0 0.0
        %665 = vmatpush.msra.mxu0 0.0
        %666 = vmatpush.msra.mxu0 0.0
        %667 = vmatpush.msra.mxu0 0.0
        %668 = vmatpush.msra.mxu0 0.0
        %669 = vmatpush.msra.mxu0 0.0
        %670 = vmatpush.msra.mxu0 0.0
        %671 = vmatpush.msra.mxu0 0.0
        %672 = vmatpush.msra.mxu0 %v648
        %673 = vmatpush.msra.mxu0 %v647
        %674 = vmatpush.msra.mxu0 %v646
        %675 = vmatpush.msra.mxu0 %v645
        %676 = vmatmul.f32.gmra.mxu0 %v655
        %v677 = vpop.f32.mrf.mxu0
        %v678 = vadd.f32 %v651, %v677
        %679 = vmatmul.f32.gmra.mxu0 %v658
        %v680 = vpop.f32.mrf.mxu0
        %v681 = vadd.f32 %v651, %v680
        %682 = vdwg.mxu0
        %683 = vxpose.xlu0.b32.start [1/16] %v678, 128
        %684 = vxpose.xlu0.b32.cont [2/16] %v681, 128
        %685 = vxpose.xlu0.b32.cont [3/16] 0.0, 128
        %686 = vxpose.xlu0.b32.cont [4/16] 0.0, 128
        %687 = vxpose.xlu0.b32.cont [5/16] 0.0, 128
        %688 = vxpose.xlu0.b32.cont [6/16] 0.0, 128
        %689 = vxpose.xlu0.b32.cont [7/16] 0.0, 128
        %690 = vxpose.xlu0.b32.cont [8/16] 0.0, 128
        %691 = vxpose.xlu0.b32.cont [9/16] 0.0, 128
        %692 = vxpose.xlu0.b32.cont [10/16] 0.0, 128
        %693 = vxpose.xlu0.b32.cont [11/16] 0.0, 128
        %694 = vxpose.xlu0.b32.cont [12/16] 0.0, 128
        %695 = vxpose.xlu0.b32.cont [13/16] 0.0, 128
        %696 = vxpose.xlu0.b32.cont [14/16] 0.0, 128
        %697 = vxpose.xlu0.b32.cont [15/16] 0.0, 128
        %698 = vxpose.xlu0.b32.end [16/16] 0.0, 128
        %v699 = vpop.trf.xlu0
        %v700 = vpop.trf.xlu0
        %v701 = vpop.trf.xlu0
        %v702 = vpop.trf.xlu0
        %v703 = vpop.trf.xlu0
        %v704 = vpop.trf.xlu0
        %v705 = vpop.trf.xlu0
        %v706 = vpop.trf.xlu0
        %v707 = vpop.trf.xlu0
        %v708 = vpop.trf.xlu0
        %v709 = vpop.trf.xlu0
        %v710 = vpop.trf.xlu0
        %v711 = vpop.trf.xlu0
        %v712 = vpop.trf.xlu0
        %v713 = vpop.trf.xlu0
        %v714 = vpop.trf.xlu0
        %v715 = vadd.f32 %v369, %v699
        %vm716 = vcmask 130048
        %717 = vst.msk [vmem:[%s354] sm:$0xff] %vm716, %v715
        %s718 = sand.u32 %s227, 1
        %s719 = scalar_lea.sflag [#allocation5], %s718
        %s720 = sand.u32 %s227, 1
        %s721 = smul.addr %s720, 8
        %s722 = scalar_lea.vmem [#allocation6], %s721
        // Predicated region
        $region57: #{tpu_custom_call.1} parent=51 // pred_check
          %p723 = pneg %p237
        $region58: #{tpu_custom_call.1} parent=51 // pred_check_branch
          %725 = sbr.rel (%p723) target = $region60
        $region59: #{tpu_custom_call.1} parent=51 // pred_region
          %727 = vsyncadd %s719, 0
          %s728 = sadd.s32 %s28, %s27
          %s729 = smul.addr %s728, 8
          %s730 = scalar_lea.hbm %s8, %s729
          %s732 = sshll.u32 %s722, 4
          %s733 = int_to_ptr.vmem [resolvable:$true] %s732
          %s734 = sshll.u32 %s730, 4
          %s735 = int_to_ptr.hbm [resolvable:$true] %s734
          %737 = dma.vmem_to_hbm [thread:$0]  %s733, 128, %s735, %s719
        $region60: #{tpu_custom_call.1} parent=51 // pred_fallthru
          _
      $region52: #{tpu_custom_call.1} parent=5 // pred_fallthru
        _
      %p738 = scmp.le.s32.totalorder 2, %s18
      // Predicated region
      $region61: #{tpu_custom_call.1} parent=5 // pred_check
        %p739 = pneg %p738
      $region62: #{tpu_custom_call.1} parent=5 // pred_check_branch
        %741 = sbr.rel (%p739) target = $region64
      $region63: #{tpu_custom_call.1} parent=5 // pred_region
        %s742 = ssub.s32 %s18, 2
        // Predicated region
        $region65: #{tpu_custom_call.1} parent=63 // pred_check
          %p743 = pneg %p243
        $region66: #{tpu_custom_call.1} parent=63 // pred_check_branch
          %745 = sbr.rel (%p743) target = $region68
        $region67: #{tpu_custom_call.1} parent=63 // pred_region
          %s746 = sand.u32 %s228, 1
          %s747 = scalar_lea.sflag [#allocation5], %s746
          %s748 = sand.u32 %s228, 1
          %s749 = smul.addr %s748, 8
          %s750 = scalar_lea.vmem [#allocation6], %s749
          %752 = dma.done %s747, 128
        $region68: #{tpu_custom_call.1} parent=63 // pred_fallthru
          _
      $region64: #{tpu_custom_call.1} parent=5 // pred_fallthru
        _
    $region6: #{tpu_custom_call.1} parent=1 // loop_footer
      %s22 = sadd.s32 1, %s18
    $region7: #{tpu_custom_call.1} parent=1 // loop_footer_branch
      %17 = sbr.rel target = $region3
    $region8: #{tpu_custom_call.1} parent=1 // loop_exit
      _
    %753 = vsyncpa [#allocation4], 1
    %s754 = scalar_lea.sflag [#allocation4], 1
    %755 = vsyncpa %s754, 1
    %756 = vsyncpa [#allocation5], 1
    %s757 = scalar_lea.sflag [#allocation5], 1
    %758 = vsyncpa %s757, 1

</llo_original>
